<compile_context>
chip_gen: v5e
topology: v5e:2x2
jax: 0.10.0
libtpu: 0.0.40
codegen_flags: <defaults>
</compile_context>

<pallas_src>
import functools

import jax
import jax.numpy as jnp
from jax.experimental import pallas as pl
from jax.experimental.pallas import tpu as pltpu

IN_FEATURES = 10
OUT_FEATURES = 1


def linear_kernel(x_ref, w_ref, b_ref, o_ref):
    # x_ref: (IN, TB) VMEM (features on sublanes, batch on lanes).
    # w_ref: (IN,) SMEM, b_ref: (1,) SMEM, o_ref: (1, TB) VMEM (lane-dense).
    x = x_ref[...]                                   # (IN, TB) f32
    # Unrolled multiply-add tree down the sublane axis; scalar SMEM weights.
    acc = x[0:1, :] * w_ref[0] + b_ref[0]            # (1, TB)
    for k in range(1, IN_FEATURES):
        acc = acc + x[k:k + 1, :] * w_ref[k]
    o_ref[...] = acc.astype(o_ref.dtype)


def _round_up(x, m):
    return pl.cdiv(x, m) * m


@functools.partial(jax.jit, static_argnames=("block_b",))
def linear_fwd_lane_dense(x_t, w_flat, b_vec, *, block_b=32 * 1024):
    """Lane-dense linear forward.

    x_t:    (IN_FEATURES, B) f32  -- batch on the lane axis.
    w_flat: (IN_FEATURES,)   f32  -- single output column of the weight.
    b_vec:  (OUT_FEATURES,)  f32.
    Returns (1, B) f32.
    """
    B = x_t.shape[1]
    # Tile along the lane (batch) axis; must be a multiple of 128 lanes.
    TB = min(_round_up(block_b, 128), _round_up(B, 128))
    grid = (pl.cdiv(B, TB),)   # ragged tail handled by Pallas write masking

    bytes_accessed = (B * IN_FEATURES * 4 + B * OUT_FEATURES * 4
                      + (IN_FEATURES + OUT_FEATURES) * 4)
    return pl.pallas_call(
        linear_kernel,
        out_shape=jax.ShapeDtypeStruct((1, B), x_t.dtype),
        grid_spec=pltpu.PrefetchScalarGridSpec(
            num_scalar_prefetch=0,
            grid=grid,
            in_specs=[
                # Activations: full feature extent, batch-tiled on lanes.
                pl.BlockSpec((IN_FEATURES, TB), lambda i: (0, i)),
                # Weight column: flat (10,) in SMEM -> scalar multiplies.
                pl.BlockSpec(memory_space=pltpu.MemorySpace.SMEM),
                # Bias: (1,) scalar in SMEM.
                pl.BlockSpec(memory_space=pltpu.MemorySpace.SMEM),
            ],
            out_specs=pl.BlockSpec((1, TB), lambda i: (0, i)),
        ),
        compiler_params=pltpu.CompilerParams(
            # Batch tiles are independent -> shard across v7x's two TCs.
            dimension_semantics=("parallel",)),
        cost_estimate=pl.CostEstimate(
            flops=2 * B * IN_FEATURES,
            transcendentals=0,
            bytes_accessed=bytes_accessed),
    )(x_t, w_flat, b_vec)


def simple_model_forward(x, w, b, *, block_b=32 * 1024, min_pallas_batch=4096):
    """x: (B, IN) f32, w: (IN, OUT=1) f32, b: (OUT,) f32 -> (B, OUT) f32."""
    B = x.shape[0]
    if B < min_pallas_batch:
        # Small-batch fallback: dispatch cost would dominate the kernel.
        return x @ w + b[None, :]
    # w[:, 0] (not reshape): stays correct if OUT_FEATURES ever grows and the
    # kernel is extended per-output-column.
    y_t = linear_fwd_lane_dense(x.T, w[:, 0], b, block_b=block_b)   # (1, B)
    return y_t.T                                                    # (B, 1)


def init_params(key):
    # Deterministic init matching nn.Linear's default bound 1/sqrt(fan_in).
    k_w, k_b = jax.random.split(key)
    bound = 1.0 / jnp.sqrt(jnp.float32(IN_FEATURES))
    w = jax.random.uniform(
        k_w, (IN_FEATURES, OUT_FEATURES), jnp.float32, -bound, bound)
    b = jax.random.uniform(
        k_b, (OUT_FEATURES,), jnp.float32, -bound, bound)
    return w, b


if __name__ == "__main__":
    key = jax.random.PRNGKey(0)
    k_x1, k_x2, k_p = jax.random.split(key, 3)

    w, b = init_params(k_p)

    # 1) Small batch (DDP-test scale) forced through the Pallas path so the
    #    kernel itself is exercised and checked (single padded block).
    B1 = 8
    x1 = jax.random.normal(k_x1, (B1, IN_FEATURES), jnp.float32)
    y1 = simple_model_forward(x1, w, b, min_pallas_batch=0)
    jax.block_until_ready(y1)
    ref1 = x1 @ w + b[None, :]
    assert y1.shape == (B1, OUT_FEATURES)
    assert jnp.allclose(y1, ref1, atol=1e-5, rtol=1e-5)

    # 2) Multi-step grid with a ragged tail (grid=3, TB=128, 44 masked lanes).
    B2 = 300
    x2 = jax.random.normal(k_x2, (B2, IN_FEATURES), jnp.float32)
    y2 = simple_model_forward(x2, w, b, block_b=128, min_pallas_batch=0)
    jax.block_until_ready(y2)
    ref2 = x2 @ w + b[None, :]
    assert y2.shape == (B2, OUT_FEATURES)
    assert jnp.allclose(y2, ref2, atol=1e-5, rtol=1e-5)

    # 3) Default dispatch: small batch takes the plain-XLA fallback.
    y3 = simple_model_forward(x1, w, b)
    jax.block_until_ready(y3)
    assert jnp.allclose(y3, ref1, atol=1e-5, rtol=1e-5)

    print("KERNEL_OK")
</pallas_src>

<mosaic_0001>
module attributes {stable_mosaic.version = 11 : i64} {
  func.func @linear_kernel(%arg0: i32, %arg1: memref<10x128xf32, #tpu.memory_space<vmem>>, %arg2: memref<10xf32, #tpu.memory_space<smem>>, %arg3: memref<1xf32, #tpu.memory_space<smem>>, %arg4: memref<1x128xf32, #tpu.memory_space<vmem>>) attributes {dimension_semantics = [#tpu.dimension_semantics<parallel>], iteration_bounds = array<i64: 1>, scalar_prefetch = 0 : i64, scratch_operands = 0 : i64, tpu.core_type = #tpu.core_type<tc>, window_params = [{transform_indices = @transform_0, window_bounds = array<i64: 10, 128>}, {transform_indices = @transform_1, window_bounds = array<i64: 10>}, {transform_indices = @transform_2, window_bounds = array<i64: 1>}, {transform_indices = @transform_3, window_bounds = array<i64: 1, 128>}]} {
    %c0 = arith.constant 0 : index
    %c0_0 = arith.constant 0 : index
    %0 = vector.load %arg1[%c0, %c0_0] : memref<10x128xf32, #tpu.memory_space<vmem>>, vector<10x128xf32>
    %1 = vector.extract_strided_slice %0 {offsets = [0, 0], sizes = [1, 128], strides = [1, 1]} : vector<10x128xf32> to vector<1x128xf32>
    %c0_1 = arith.constant 0 : index
    %2 = memref.load %arg2[%c0_1] : memref<10xf32, #tpu.memory_space<smem>>
    %3 = vector.broadcast %2 : f32 to vector<1x128xf32>
    %4 = arith.mulf %1, %3 : vector<1x128xf32>
    %c0_2 = arith.constant 0 : index
    %5 = memref.load %arg3[%c0_2] : memref<1xf32, #tpu.memory_space<smem>>
    %6 = vector.broadcast %5 : f32 to vector<1x128xf32>
    %7 = arith.addf %4, %6 : vector<1x128xf32>
    %8 = vector.extract_strided_slice %0 {offsets = [1, 0], sizes = [1, 128], strides = [1, 1]} : vector<10x128xf32> to vector<1x128xf32>
    %c1 = arith.constant 1 : index
    %9 = memref.load %arg2[%c1] : memref<10xf32, #tpu.memory_space<smem>>
    %10 = vector.broadcast %9 : f32 to vector<1x128xf32>
    %11 = arith.mulf %8, %10 : vector<1x128xf32>
    %12 = arith.addf %7, %11 : vector<1x128xf32>
    %13 = vector.extract_strided_slice %0 {offsets = [2, 0], sizes = [1, 128], strides = [1, 1]} : vector<10x128xf32> to vector<1x128xf32>
    %c2 = arith.constant 2 : index
    %14 = memref.load %arg2[%c2] : memref<10xf32, #tpu.memory_space<smem>>
    %15 = vector.broadcast %14 : f32 to vector<1x128xf32>
    %16 = arith.mulf %13, %15 : vector<1x128xf32>
    %17 = arith.addf %12, %16 : vector<1x128xf32>
    %18 = vector.extract_strided_slice %0 {offsets = [3, 0], sizes = [1, 128], strides = [1, 1]} : vector<10x128xf32> to vector<1x128xf32>
    %c3 = arith.constant 3 : index
    %19 = memref.load %arg2[%c3] : memref<10xf32, #tpu.memory_space<smem>>
    %20 = vector.broadcast %19 : f32 to vector<1x128xf32>
    %21 = arith.mulf %18, %20 : vector<1x128xf32>
    %22 = arith.addf %17, %21 : vector<1x128xf32>
    %23 = vector.extract_strided_slice %0 {offsets = [4, 0], sizes = [1, 128], strides = [1, 1]} : vector<10x128xf32> to vector<1x128xf32>
    %c4 = arith.constant 4 : index
    %24 = memref.load %arg2[%c4] : memref<10xf32, #tpu.memory_space<smem>>
    %25 = vector.broadcast %24 : f32 to vector<1x128xf32>
    %26 = arith.mulf %23, %25 : vector<1x128xf32>
    %27 = arith.addf %22, %26 : vector<1x128xf32>
    %28 = vector.extract_strided_slice %0 {offsets = [5, 0], sizes = [1, 128], strides = [1, 1]} : vector<10x128xf32> to vector<1x128xf32>
    %c5 = arith.constant 5 : index
    %29 = memref.load %arg2[%c5] : memref<10xf32, #tpu.memory_space<smem>>
    %30 = vector.broadcast %29 : f32 to vector<1x128xf32>
    %31 = arith.mulf %28, %30 : vector<1x128xf32>
    %32 = arith.addf %27, %31 : vector<1x128xf32>
    %33 = vector.extract_strided_slice %0 {offsets = [6, 0], sizes = [1, 128], strides = [1, 1]} : vector<10x128xf32> to vector<1x128xf32>
    %c6 = arith.constant 6 : index
    %34 = memref.load %arg2[%c6] : memref<10xf32, #tpu.memory_space<smem>>
    %35 = vector.broadcast %34 : f32 to vector<1x128xf32>
    %36 = arith.mulf %33, %35 : vector<1x128xf32>
    %37 = arith.addf %32, %36 : vector<1x128xf32>
    %38 = vector.extract_strided_slice %0 {offsets = [7, 0], sizes = [1, 128], strides = [1, 1]} : vector<10x128xf32> to vector<1x128xf32>
    %c7 = arith.constant 7 : index
    %39 = memref.load %arg2[%c7] : memref<10xf32, #tpu.memory_space<smem>>
    %40 = vector.broadcast %39 : f32 to vector<1x128xf32>
    %41 = arith.mulf %38, %40 : vector<1x128xf32>
    %42 = arith.addf %37, %41 : vector<1x128xf32>
    %43 = vector.extract_strided_slice %0 {offsets = [8, 0], sizes = [1, 128], strides = [1, 1]} : vector<10x128xf32> to vector<1x128xf32>
    %c8 = arith.constant 8 : index
    %44 = memref.load %arg2[%c8] : memref<10xf32, #tpu.memory_space<smem>>
    %45 = vector.broadcast %44 : f32 to vector<1x128xf32>
    %46 = arith.mulf %43, %45 : vector<1x128xf32>
    %47 = arith.addf %42, %46 : vector<1x128xf32>
    %48 = vector.extract_strided_slice %0 {offsets = [9, 0], sizes = [1, 128], strides = [1, 1]} : vector<10x128xf32> to vector<1x128xf32>
    %c9 = arith.constant 9 : index
    %49 = memref.load %arg2[%c9] : memref<10xf32, #tpu.memory_space<smem>>
    %50 = vector.broadcast %49 : f32 to vector<1x128xf32>
    %51 = arith.mulf %48, %50 : vector<1x128xf32>
    %52 = arith.addf %47, %51 : vector<1x128xf32>
    %c0_3 = arith.constant 0 : index
    %c0_4 = arith.constant 0 : index
    %53 = vector.load %arg4[%c0_3, %c0_4] : memref<1x128xf32, #tpu.memory_space<vmem>>, vector<1x128xf32>
    tpu.vector_store %arg4[%c0_3, %c0_4], %52 {strides = array<i32>} : memref<1x128xf32, #tpu.memory_space<vmem>>, vector<1x128xf32>,
    return
  }
  func.func @transform_0(%arg0: i32) -> (i32, i32) {
    %c0_i32 = arith.constant 0 : i32
    %c0_i32_0 = arith.constant 0 : i32
    return %c0_i32, %arg0 : i32, i32
  }
  func.func @transform_1(%arg0: i32) -> i32 {
    %c0_i32 = arith.constant 0 : i32
    %c0_i32_0 = arith.constant 0 : i32
    return %c0_i32 : i32
  }
  func.func @transform_2(%arg0: i32) -> i32 {
    %c0_i32 = arith.constant 0 : i32
    %c0_i32_0 = arith.constant 0 : i32
    return %c0_i32 : i32
  }
  func.func @transform_3(%arg0: i32) -> (i32, i32) {
    %c0_i32 = arith.constant 0 : i32
    %c0_i32_0 = arith.constant 0 : i32
    return %c0_i32, %arg0 : i32, i32
  }
}

</mosaic_0001>

<llo_original>
// kernel: linear_fwd_lane_dense.1
$region0: #{linear_fwd_lane_dense.1}
  #allocation0 [shape = 'u32[]', space=smem, size = 0x4, offset = 0x4, fixed_abs, tag = 'smem constant byte address 0x4 - core index']
  #allocation1 [shape = 'u32[72,128]{1,0:T(1,128)}', space=vmem, size = 0x9000, scoped, tag = 'internal scratch']
  #allocation2 [shape = 'f32[1]{0:T(128)S(6)}', space=smem, size = 0x200, scoped, tag = 'scoped memory for linear_fwd_lane_dense.1']
  %s0 = inlined_call_operand.vmem [shape: f32[10,8], index: 0, kind: input, shape index: {}]
  %s1 = inlined_call_operand.vmem [shape: f32[10], index: 1, kind: input, shape index: {}]
  %s2 = inlined_call_operand.<no memory space> [shape: f32[1], index: 2, kind: input, shape index: {}]
  %s3 = inlined_call_operand.hbm [shape: f32[1,8], index: 3, kind: output, shape index: {}]
  %s4 = sld [smem:[#allocation0]]
  $region26: #{linear_fwd_lane_dense.1} parent=0
    _
  %s6 = ssub.s32 1, %s4
  %s7 = scalar_select 0, %s6, %s4
  %8 = sst [smem:[#allocation2]] %s2
  $region1: #{linear_fwd_lane_dense.1} parent=0
    #allocation3 [shape = 'u8[512]{0}', space=smem, size = 0x200, scoped, tag = 'input window, operand 1, single buffered']
    #allocation4 [shape = 's32[1]{0}', space=sflag, size = 0x4, scoped, tag = 'scoped memory for linear_fwd_lane_dense.1']
    #allocation5 [shape = 's32[1]{0}', space=sflag, size = 0x4, scoped, tag = 'scoped memory for linear_fwd_lane_dense.1']
    #allocation6 [shape = 'u8[512]{0}', space=vmem, size = 0x400, scoped, tag = 'output window, operand 0, single buffered']
    %9 = vsyncpa [#allocation5], 0
    %10 = vsyncpa [#allocation4], 0
    // Predicated region
    $region2: #{linear_fwd_lane_dense.1} parent=1 // pred_check
      _
    $region3: #{linear_fwd_lane_dense.1} parent=1 // pred_check_branch
      %12 = sbr.rel (0) target = $region5
    $region4: #{linear_fwd_lane_dense.1} parent=1 // pred_region
      _
    $region5: #{linear_fwd_lane_dense.1} parent=1 // pred_fallthru
      _
    // Predicated region
    $region6: #{linear_fwd_lane_dense.1} parent=1 // pred_check
      _
    $region7: #{linear_fwd_lane_dense.1} parent=1 // pred_check_branch
      %14 = sbr.rel (0) target = $region9
    $region8: #{linear_fwd_lane_dense.1} parent=1 // pred_region
      %16 = vsyncadd [#allocation5], 0
      %s18 = sshll.u32 %s1, 4
      %s19 = int_to_ptr.vmem [resolvable:$true] %s18
      %21 = dma.vmem_to_smem %s19, 16, [#allocation3], [#allocation5]
    $region9: #{linear_fwd_lane_dense.1} parent=1 // pred_fallthru
      _
    // Predicated region
    $region10: #{linear_fwd_lane_dense.1} parent=1 // pred_check
      _
    $region11: #{linear_fwd_lane_dense.1} parent=1 // pred_check_branch
      %23 = sbr.rel (0) target = $region13
    $region12: #{linear_fwd_lane_dense.1} parent=1 // pred_region
      _
    $region13: #{linear_fwd_lane_dense.1} parent=1 // pred_fallthru
      _
    // Predicated region
    $region14: #{linear_fwd_lane_dense.1} parent=1 // pred_check
      _
    $region15: #{linear_fwd_lane_dense.1} parent=1 // pred_check_branch
      %25 = sbr.rel (0) target = $region17
    $region16: #{linear_fwd_lane_dense.1} parent=1 // pred_region
      %27 = dma.done [#allocation5], 16
    $region17: #{linear_fwd_lane_dense.1} parent=1 // pred_fallthru
      _
    %28 = sfence
    %v29 = vld [vmem:[%s0] sm:$0xff]
    %v30 = vld [vmem:[%s0 + $0x8] sm:$0x3]
    %s31 = sld [smem:[#allocation3]]
    %v32 = vstv %s31
    %v33 = vmul.f32 %v29, %v32
    %s34 = sld [smem:[#allocation2]]
    %v35 = vstv %s34
    %v36 = vadd.f32 %v33, %v35
    %s37 = sld [smem:[#allocation3 + $0x1]]
    %v38 = vstv %s37
    %v39 = vmul.f32 %v29, %v38
    %v41 = vrot.slane %v39, 1
    %v43 = vadd.f32 %v36, %v41
    %s44 = sld [smem:[#allocation3 + $0x2]]
    %v45 = vstv %s44
    %v46 = vmul.f32 %v29, %v45
    %v48 = vrot.slane %v46, 2
    %v50 = vadd.f32 %v43, %v48
    %s51 = sld [smem:[#allocation3 + $0x3]]
    %v52 = vstv %s51
    %v53 = vmul.f32 %v29, %v52
    %v55 = vrot.slane %v53, 3
    %v57 = vadd.f32 %v50, %v55
    %s58 = sld [smem:[#allocation3 + $0x4]]
    %v59 = vstv %s58
    %v60 = vmul.f32 %v29, %v59
    %v62 = vrot.slane %v60, 4
    %v64 = vadd.f32 %v57, %v62
    %s65 = sld [smem:[#allocation3 + $0x5]]
    %v66 = vstv %s65
    %v67 = vmul.f32 %v29, %v66
    %v69 = vrot.slane %v67, 5
    %v71 = vadd.f32 %v64, %v69
    %s72 = sld [smem:[#allocation3 + $0x6]]
    %v73 = vstv %s72
    %v74 = vmul.f32 %v29, %v73
    %v76 = vrot.slane %v74, 6
    %v78 = vadd.f32 %v71, %v76
    %s79 = sld [smem:[#allocation3 + $0x7]]
    %v80 = vstv %s79
    %v81 = vmul.f32 %v29, %v80
    %v83 = vrot.slane %v81, 7
    %v85 = vadd.f32 %v78, %v83
    %s86 = sld [smem:[#allocation3 + $0x8]]
    %v87 = vstv %s86
    %v88 = vmul.f32 %v30, %v87
    %v89 = vadd.f32 %v85, %v88
    %s90 = sld [smem:[#allocation3 + $0x9]]
    %v91 = vstv %s90
    %v92 = vmul.f32 %v30, %v91
    %v94 = vrot.slane %v92, 1
    %v96 = vadd.f32 %v89, %v94
    %97 = vst [vmem:[#allocation6] sm:$0x1] %v96
    // Predicated region
    $region18: #{linear_fwd_lane_dense.1} parent=1 // pred_check
      _
    $region19: #{linear_fwd_lane_dense.1} parent=1 // pred_check_branch
      %99 = sbr.rel (0) target = $region21
    $region20: #{linear_fwd_lane_dense.1} parent=1 // pred_region
      %101 = vsyncadd [#allocation4], 0
      %s103 = sshll.u32 [#allocation6], 4
      %s104 = int_to_ptr.vmem [resolvable:$true] %s103
      %s105 = sshll.u32 %s3, 4
      %s106 = int_to_ptr.hbm [resolvable:$true] %s105
      %108 = dma.vmem_to_hbm [thread:$0]  %s104, 16, %s106, [#allocation4]
    $region21: #{linear_fwd_lane_dense.1} parent=1 // pred_fallthru
      _
    // Predicated region
    $region22: #{linear_fwd_lane_dense.1} parent=1 // pred_check
      _
    $region23: #{linear_fwd_lane_dense.1} parent=1 // pred_check_branch
      %110 = sbr.rel (0) target = $region25
    $region24: #{linear_fwd_lane_dense.1} parent=1 // pred_region
      %112 = dma.done [#allocation4], 16
    $region25: #{linear_fwd_lane_dense.1} parent=1 // pred_fallthru
      _
    %113 = vsyncpa [#allocation4], 1
    %114 = vsyncpa [#allocation5], 1

</llo_original>
